<compile_context>
chip_gen: v6e
topology: v6e:2x2x1
jax: 0.10.0
libtpu: 0.0.40
codegen_flags: <defaults>
</compile_context>

<pallas_src>
import functools

import jax
import jax.numpy as jnp
from jax.experimental import pallas as pl
from jax.experimental.pallas import tpu as pltpu


def _round_up(v, m):
    return ((v + m - 1) // m) * m


def _ffn_kernel(x_ref, w1_ref, b1_ref, w2_ref, b2_ref, o_ref, acc_ref):
    # x_ref:  (tn, Dp)   token tile (constant across the H grid axis -> fetched once)
    # w1_ref: (Dp, th)   first-layer weight slab for this H tile
    # b1_ref: (1, th)    f32 bias slice
    # w2_ref: (th, Dp)   second-layer weight slab for this H tile
    # b2_ref: (1, Dp)    f32 bias (grid-invariant)
    # o_ref:  (tn, Dp)   output tile (written only on the last H step)
    # acc_ref:(tn, Dp)   f32 accumulator scratch
    h_idx = pl.program_id(1)

    @pl.when(h_idx == 0)
    def _():
        acc_ref[...] = jnp.zeros_like(acc_ref)

    # First matmul + bias + ReLU, all accumulated / applied in f32.
    h = jnp.dot(x_ref[...], w1_ref[...], preferred_element_type=jnp.float32)
    h = jnp.maximum(h + b1_ref[...], 0.0)

    # Second matmul: cast the activation back to the MXU dtype, accumulate in f32.
    acc_ref[...] += jnp.dot(h.astype(w2_ref.dtype), w2_ref[...],
                            preferred_element_type=jnp.float32)

    @pl.when(h_idx == pl.num_programs(1) - 1)
    def _():
        o_ref[...] = (acc_ref[...] + b2_ref[...]).astype(o_ref.dtype)


@functools.partial(jax.jit, static_argnames=("tile_n", "tile_h", "compute_dtype"))
def feed_forward(x, w1, b1, w2, b2, *, tile_n=256, tile_h=512,
                 compute_dtype=jnp.bfloat16):
    """x: (B, S, D).  w1: (D, 4D), b1: (4D,), w2: (4D, D), b2: (D,).

    Returns (B, S, D) in x.dtype (eval-mode dropout == identity).
    """
    B, S, D = x.shape
    H = w1.shape[1]
    N = B * S

    assert tile_n % 8 == 0 and tile_h % 128 == 0

    # Clamp tiles to the (padded) problem size, then pad so the grid is exact.
    Dp = _round_up(D, 128)                      # lane-dense activations / output
    tn = min(tile_n, _round_up(N, 8))
    th = min(tile_h, _round_up(H, 128))
    Np = _round_up(N, tn)
    Hp = _round_up(H, th)

    cdt = compute_dtype
    x2d = jnp.pad(x.reshape(N, D), ((0, Np - N), (0, Dp - D))).astype(cdt)
    w1p = jnp.pad(w1, ((0, Dp - D), (0, Hp - H))).astype(cdt)
    w2p = jnp.pad(w2, ((0, Hp - H), (0, Dp - D))).astype(cdt)
    b1p = jnp.pad(b1, (0, Hp - H)).astype(jnp.float32).reshape(1, Hp)
    b2p = jnp.pad(b2, (0, Dp - D)).astype(jnp.float32).reshape(1, Dp)

    grid = (Np // tn, Hp // th)                 # (parallel tokens, reduction over H)

    itemsize = jnp.dtype(cdt).itemsize
    cost = pl.CostEstimate(
        flops=4 * Np * Dp * Hp,
        transcendentals=0,
        bytes_accessed=(2 * Dp * Hp * itemsize) * grid[0]     # weights per token tile
        + Np * Dp * (itemsize + jnp.dtype(x.dtype).itemsize), # x in + out
    )

    out2d = pl.pallas_call(
        _ffn_kernel,
        out_shape=jax.ShapeDtypeStruct((Np, Dp), x.dtype),
        grid_spec=pltpu.PrefetchScalarGridSpec(
            num_scalar_prefetch=0,
            grid=grid,
            in_specs=[
                pl.BlockSpec((tn, Dp), lambda i, h: (i, 0)),   # x tile (reused over h)
                pl.BlockSpec((Dp, th), lambda i, h: (0, h)),   # W1 H-slab
                pl.BlockSpec((1, th), lambda i, h: (0, h)),    # b1 slice
                pl.BlockSpec((th, Dp), lambda i, h: (h, 0)),   # W2 H-slab
                pl.BlockSpec((1, Dp), lambda i, h: (0, 0)),    # b2 (grid-invariant)
            ],
            out_specs=pl.BlockSpec((tn, Dp), lambda i, h: (i, 0)),
            scratch_shapes=[pltpu.VMEM((tn, Dp), jnp.float32)],
        ),
        compiler_params=pltpu.CompilerParams(
            dimension_semantics=("parallel", "arbitrary"),
            vmem_limit_bytes=64 * 1024 * 1024,
        ),
        cost_estimate=cost,
    )(x2d, w1p, b1p, w2p, b2p)

    return out2d[:N, :D].reshape(B, S, D)


def _init_params(key, num_embeds):
    """Deterministic PyTorch-style uniform(-1/sqrt(fan_in), 1/sqrt(fan_in)) init."""
    hidden = 4 * num_embeds
    k1, k2, k3, k4 = jax.random.split(key, 4)
    bound1 = 1.0 / jnp.sqrt(num_embeds)
    bound2 = 1.0 / jnp.sqrt(hidden)
    w1 = jax.random.uniform(k1, (num_embeds, hidden), jnp.float32, -bound1, bound1)
    b1 = jax.random.uniform(k2, (hidden,), jnp.float32, -bound1, bound1)
    w2 = jax.random.uniform(k3, (hidden, num_embeds), jnp.float32, -bound2, bound2)
    b2 = jax.random.uniform(k4, (num_embeds,), jnp.float32, -bound2, bound2)
    return w1, b1, w2, b2


if __name__ == "__main__":
    B, S, D = 2, 8, 32          # batch, seq, num_embeds -> hidden = 128
    key = jax.random.PRNGKey(0)
    kx, kp = jax.random.split(key)

    x = jax.random.normal(kx, (B, S, D), jnp.float32)
    w1, b1, w2, b2 = _init_params(kp, D)

    out = feed_forward(x, w1, b1, w2, b2)
    out = jax.block_until_ready(out)

    # Reference in plain JAX with the same bf16-operand / f32-accumulate recipe
    # (eval-mode dropout = identity).
    cdt = jnp.bfloat16
    x2d = x.reshape(-1, D)
    h_ref = jnp.maximum(
        jnp.dot(x2d.astype(cdt), w1.astype(cdt),
                preferred_element_type=jnp.float32) + b1, 0.0)
    ref = jnp.dot(h_ref.astype(cdt), w2.astype(cdt),
                  preferred_element_type=jnp.float32) + b2
    ref = ref.reshape(B, S, D)
    assert jnp.allclose(out, ref, atol=2e-3, rtol=2e-3), "mismatch vs reference"

    print("KERNEL_OK")
</pallas_src>

<mosaic_0001>
module attributes {stable_mosaic.version = 11 : i64} {
  func.func @_ffn_kernel(%arg0: i32, %arg1: i32, %arg2: memref<16x128xbf16, #tpu.memory_space<vmem>>, %arg3: memref<128x128xbf16, #tpu.memory_space<vmem>>, %arg4: memref<1x128xf32, #tpu.memory_space<vmem>>, %arg5: memref<128x128xbf16, #tpu.memory_space<vmem>>, %arg6: memref<1x128xf32, #tpu.memory_space<vmem>>, %arg7: memref<16x128xf32, #tpu.memory_space<vmem>>, %arg8: memref<16x128xf32, #tpu.memory_space<vmem>>) attributes {dimension_semantics = [#tpu.dimension_semantics<parallel>, #tpu.dimension_semantics<arbitrary>], iteration_bounds = array<i64: 1, 1>, scalar_prefetch = 0 : i64, scratch_operands = 1 : i64, tpu.core_type = #tpu.core_type<tc>, window_params = [{transform_indices = @transform_0, window_bounds = array<i64: 16, 128>}, {transform_indices = @transform_1, window_bounds = array<i64: 128, 128>}, {transform_indices = @transform_2, window_bounds = array<i64: 1, 128>}, {transform_indices = @transform_3, window_bounds = array<i64: 128, 128>}, {pipeline_mode = #tpu.pipeline_mode<synchronous>, transform_indices = @transform_4, window_bounds = array<i64: 1, 128>}, {transform_indices = @transform_5, window_bounds = array<i64: 16, 128>}]} {
    %c0_i32 = arith.constant 0 : i32
    %0 = arith.cmpi eq, %arg1, %c0_i32 : i32
    %1 = arith.extui %0 : i1 to i32
    %c0_i32_0 = arith.constant 0 : i32
    %2 = arith.cmpi ne, %1, %c0_i32_0 : i32
    scf.if %2 {
      %cst_16 = arith.constant 0.000000e+00 : f32
      %20 = vector.broadcast %cst_16 : f32 to vector<16x128xf32>
      %c0_17 = arith.constant 0 : index
      %c0_18 = arith.constant 0 : index
      %21 = vector.load %arg8[%c0_17, %c0_18] : memref<16x128xf32, #tpu.memory_space<vmem>>, vector<16x128xf32>
      tpu.vector_store %arg8[%c0_17, %c0_18], %20 {strides = array<i32>} : memref<16x128xf32, #tpu.memory_space<vmem>>, vector<16x128xf32>,
    } else {
    }
    %c0 = arith.constant 0 : index
    %c0_1 = arith.constant 0 : index
    %3 = vector.load %arg2[%c0, %c0_1] : memref<16x128xbf16, #tpu.memory_space<vmem>>, vector<16x128xbf16>
    %c0_2 = arith.constant 0 : index
    %c0_3 = arith.constant 0 : index
    %4 = vector.load %arg3[%c0_2, %c0_3] : memref<128x128xbf16, #tpu.memory_space<vmem>>, vector<128x128xbf16>
    %cst = arith.constant dense<0.000000e+00> : vector<16x128xf32>
    %5 = tpu.matmul %3, %4, %cst {dimension_numbers = #tpu.dot_dimension_numbers<[1], [0], [0], [1], [0, 0, 1, 1], [], []>} : vector<16x128xbf16>, vector<128x128xbf16>, vector<16x128xf32> -> vector<16x128xf32>
    %c0_4 = arith.constant 0 : index
    %c0_5 = arith.constant 0 : index
    %6 = vector.load %arg4[%c0_4, %c0_5] : memref<1x128xf32, #tpu.memory_space<vmem>>, vector<1x128xf32>
    %7 = vector.broadcast %6 : vector<1x128xf32> to vector<16x128xf32>
    %8 = arith.addf %5, %7 : vector<16x128xf32>
    %cst_6 = arith.constant 0.000000e+00 : f32
    %9 = vector.broadcast %cst_6 : f32 to vector<16x128xf32>
    %10 = arith.maximumf %8, %9 : vector<16x128xf32>
    %c0_7 = arith.constant 0 : index
    %c0_8 = arith.constant 0 : index
    %11 = vector.load %arg8[%c0_7, %c0_8] : memref<16x128xf32, #tpu.memory_space<vmem>>, vector<16x128xf32>
    %12 = arith.truncf %10 : vector<16x128xf32> to vector<16x128xbf16>
    %c0_9 = arith.constant 0 : index
    %c0_10 = arith.constant 0 : index
    %13 = vector.load %arg5[%c0_9, %c0_10] : memref<128x128xbf16, #tpu.memory_space<vmem>>, vector<128x128xbf16>
    %cst_11 = arith.constant dense<0.000000e+00> : vector<16x128xf32>
    %14 = tpu.matmul %12, %13, %cst_11 {dimension_numbers = #tpu.dot_dimension_numbers<[1], [0], [0], [1], [0, 0, 1, 1], [], []>} : vector<16x128xbf16>, vector<128x128xbf16>, vector<16x128xf32> -> vector<16x128xf32>
    %15 = arith.addf %11, %14 : vector<16x128xf32>
    %c0_12 = arith.constant 0 : index
    %c0_13 = arith.constant 0 : index
    %16 = vector.load %arg8[%c0_12, %c0_13] : memref<16x128xf32, #tpu.memory_space<vmem>>, vector<16x128xf32>
    tpu.vector_store %arg8[%c0_12, %c0_13], %15 {strides = array<i32>} : memref<16x128xf32, #tpu.memory_space<vmem>>, vector<16x128xf32>,
    %c0_i32_14 = arith.constant 0 : i32
    %17 = arith.cmpi eq, %arg1, %c0_i32_14 : i32
    %18 = arith.extui %17 : i1 to i32
    %c0_i32_15 = arith.constant 0 : i32
    %19 = arith.cmpi ne, %18, %c0_i32_15 : i32
    scf.if %19 {
      %c0_16 = arith.constant 0 : index
      %c0_17 = arith.constant 0 : index
      %20 = vector.load %arg8[%c0_16, %c0_17] : memref<16x128xf32, #tpu.memory_space<vmem>>, vector<16x128xf32>
      %c0_18 = arith.constant 0 : index
      %c0_19 = arith.constant 0 : index
      %21 = vector.load %arg6[%c0_18, %c0_19] : memref<1x128xf32, #tpu.memory_space<vmem>>, vector<1x128xf32>
      %22 = vector.broadcast %21 : vector<1x128xf32> to vector<16x128xf32>
      %23 = arith.addf %20, %22 : vector<16x128xf32>
      %c0_20 = arith.constant 0 : index
      %c0_21 = arith.constant 0 : index
      %24 = vector.load %arg7[%c0_20, %c0_21] : memref<16x128xf32, #tpu.memory_space<vmem>>, vector<16x128xf32>
      tpu.vector_store %arg7[%c0_20, %c0_21], %23 {strides = array<i32>} : memref<16x128xf32, #tpu.memory_space<vmem>>, vector<16x128xf32>,
    } else {
    }
    return
  }
  func.func @transform_0(%arg0: i32, %arg1: i32) -> (i32, i32) {
    %c0_i32 = arith.constant 0 : i32
    %c0_i32_0 = arith.constant 0 : i32
    return %arg0, %c0_i32 : i32, i32
  }
  func.func @transform_1(%arg0: i32, %arg1: i32) -> (i32, i32) {
    %c0_i32 = arith.constant 0 : i32
    %c0_i32_0 = arith.constant 0 : i32
    return %c0_i32, %arg1 : i32, i32
  }
  func.func @transform_2(%arg0: i32, %arg1: i32) -> (i32, i32) {
    %c0_i32 = arith.constant 0 : i32
    %c0_i32_0 = arith.constant 0 : i32
    return %c0_i32, %arg1 : i32, i32
  }
  func.func @transform_3(%arg0: i32, %arg1: i32) -> (i32, i32) {
    %c0_i32 = arith.constant 0 : i32
    %c0_i32_0 = arith.constant 0 : i32
    return %arg1, %c0_i32 : i32, i32
  }
  func.func @transform_4(%arg0: i32, %arg1: i32) -> (i32, i32) {
    %c0_i32 = arith.constant 0 : i32
    %c0_i32_0 = arith.constant 0 : i32
    %c0_i32_1 = arith.constant 0 : i32
    return %c0_i32, %c0_i32_0 : i32, i32
  }
  func.func @transform_5(%arg0: i32, %arg1: i32) -> (i32, i32) {
    %c0_i32 = arith.constant 0 : i32
    %c0_i32_0 = arith.constant 0 : i32
    return %arg0, %c0_i32 : i32, i32
  }
}

</mosaic_0001>

<llo_original>
// kernel: feed_forward.1
$region0: #{feed_forward.1}
  #allocation0 [shape = 'u32[]', space=smem, size = 0x4, offset = 0x4, fixed_abs, tag = 'smem constant byte address 0x4 - core index']
  #allocation1 [shape = 'u32[144,128]{1,0:T(1,128)}', space=vmem, size = 0x12000, scoped, tag = 'internal scratch']
  #allocation2 [shape = 'f32[16,128]{1,0:T(8,128)}', space=vmem, size = 0x2000, scoped, tag = 'scratch operand']
  %s0 = inlined_call_operand.vmem [shape: bf16[16,128], index: 0, kind: input, shape index: {}]
  %s1 = inlined_call_operand.vmem [shape: bf16[128,128], index: 1, kind: input, shape index: {}]
  %s2 = inlined_call_operand.vmem [shape: f32[1,128], index: 2, kind: input, shape index: {}]
  %s3 = inlined_call_operand.vmem [shape: bf16[128,128], index: 3, kind: input, shape index: {}]
  %s4 = inlined_call_operand.vmem [shape: f32[1,128], index: 4, kind: input, shape index: {}]
  %s5 = inlined_call_operand.vmem [shape: f32[16,128], index: 5, kind: output, shape index: {}]
  %s6 = sld [smem:[#allocation0]]
  $region38: #{feed_forward.1} parent=0
    _
  %s8 = ssub.s32 1, %s6
  %s9 = scalar_select 0, %s8, %s6
  // Predicated region
  $region2: #{feed_forward.1} parent=0 // pred_check
    _
  $region3: #{feed_forward.1} parent=0 // pred_check_branch
    %11 = sbr.rel (0) target = $region5
  $region4: #{feed_forward.1} parent=0 // pred_region
    _
  $region5: #{feed_forward.1} parent=0 // pred_fallthru
    _
  // Predicated region
  $region6: #{feed_forward.1} parent=0 // pred_check
    _
  $region7: #{feed_forward.1} parent=0 // pred_check_branch
    %13 = sbr.rel (0) target = $region9
  $region8: #{feed_forward.1} parent=0 // pred_region
    _
  $region9: #{feed_forward.1} parent=0 // pred_fallthru
    _
  // Predicated region
  $region10: #{feed_forward.1} parent=0 // pred_check
    _
  $region11: #{feed_forward.1} parent=0 // pred_check_branch
    %15 = sbr.rel (0) target = $region13
  $region12: #{feed_forward.1} parent=0 // pred_region
    _
  $region13: #{feed_forward.1} parent=0 // pred_fallthru
    _
  // Predicated region
  $region14: #{feed_forward.1} parent=0 // pred_check
    _
  $region15: #{feed_forward.1} parent=0 // pred_check_branch
    %17 = sbr.rel (0) target = $region17
  $region16: #{feed_forward.1} parent=0 // pred_region
    _
  $region17: #{feed_forward.1} parent=0 // pred_fallthru
    _
  // Predicated region
  $region18: #{feed_forward.1} parent=0 // pred_check
    _
  $region19: #{feed_forward.1} parent=0 // pred_check_branch
    %19 = sbr.rel (0) target = $region21
  $region20: #{feed_forward.1} parent=0 // pred_region
    _
  $region21: #{feed_forward.1} parent=0 // pred_fallthru
    _
  %p21 = scmp.eq.s32.totalorder 0, 0
  // Predicated region
  $region22: #{feed_forward.1} parent=0 // pred_check
    %p22 = pneg %p21
  $region23: #{feed_forward.1} parent=0 // pred_check_branch
    %24 = sbr.rel (%p22) target = $region25
  $region24: #{feed_forward.1} parent=0 // pred_region
    %25 = vst [vmem:[#allocation2] sm:$0xff] 0.0
    %26 = vst [vmem:[#allocation2 + $0x8] sm:$0xff] 0.0
  $region25: #{feed_forward.1} parent=0 // pred_fallthru
    _
  %v27 = vld [vmem:[%s0] sm:$0xf]
  %v28 = vld [vmem:[%s0 + $0x4] sm:$0xf]
  %v29 = vld [vmem:[%s1] sm:$0xf]
  %v30 = vld [vmem:[%s1 + $0x4] sm:$0xf]
  %v31 = vld [vmem:[%s1 + $0x8] sm:$0xf]
  %v32 = vld [vmem:[%s1 + $0xc] sm:$0xf]
  %v33 = vld [vmem:[%s1 + $0x10] sm:$0xf]
  %v34 = vld [vmem:[%s1 + $0x14] sm:$0xf]
  %v35 = vld [vmem:[%s1 + $0x18] sm:$0xf]
  %v36 = vld [vmem:[%s1 + $0x1c] sm:$0xf]
  %v37 = vld [vmem:[%s1 + $0x20] sm:$0xf]
  %v38 = vld [vmem:[%s1 + $0x24] sm:$0xf]
  %v39 = vld [vmem:[%s1 + $0x28] sm:$0xf]
  %v40 = vld [vmem:[%s1 + $0x2c] sm:$0xf]
  %v41 = vld [vmem:[%s1 + $0x30] sm:$0xf]
  %v42 = vld [vmem:[%s1 + $0x34] sm:$0xf]
  %v43 = vld [vmem:[%s1 + $0x38] sm:$0xf]
  %v44 = vld [vmem:[%s1 + $0x3c] sm:$0xf]
  %v45 = vld [vmem:[%s2] sm:$0x1]
  %v47 = vlaneseq
  %v48 = vshrl.u32 %v47, 7
  %v49 = vsub.s32 0, %v48
  %v50 = vrot.slane %v45, %v49
  %v54 = vunpack.c.l.b16 %v27
  %v55 = vunpack.c.l.b16 %v28
  %v56 = vpack.c.b16 %v55, %v54
  %v74 = vunpack.c.l.b16 %v29
  %v75 = vunpack.c.l.b16 %v30
  %v76 = vunpack.c.l.b16 %v31
  %v77 = vunpack.c.l.b16 %v32
  %v78 = vunpack.c.l.b16 %v33
  %v79 = vunpack.c.l.b16 %v34
  %v80 = vunpack.c.l.b16 %v35
  %v81 = vunpack.c.l.b16 %v36
  %v82 = vunpack.c.l.b16 %v37
  %v83 = vunpack.c.l.b16 %v38
  %v84 = vunpack.c.l.b16 %v39
  %v85 = vunpack.c.l.b16 %v40
  %v86 = vunpack.c.l.b16 %v41
  %v87 = vunpack.c.l.b16 %v42
  %v88 = vunpack.c.l.b16 %v43
  %v89 = vunpack.c.l.b16 %v44
  %v90 = vpack.c.b16 %v75, %v74
  %v91 = vpack.c.b16 %v77, %v76
  %v92 = vpack.c.b16 %v79, %v78
  %v93 = vpack.c.b16 %v81, %v80
  %v94 = vpack.c.b16 %v83, %v82
  %v95 = vpack.c.b16 %v85, %v84
  %v96 = vpack.c.b16 %v87, %v86
  %v97 = vpack.c.b16 %v89, %v88
  %106 = vmatprep.subr.bf16.mxu0 0
  %107 = vmatpush1.bf16.msra.mxu0 %v97
  %108 = vmatprep.subr.bf16.mxu0 0
  %109 = vmatpush1.bf16.msra.mxu0 %v96
  %110 = vmatprep.subr.bf16.mxu0 0
  %111 = vmatpush1.bf16.msra.mxu0 %v95
  %112 = vmatprep.subr.bf16.mxu0 0
  %113 = vmatpush1.bf16.msra.mxu0 %v94
  %114 = vmatprep.subr.bf16.mxu0 0
  %115 = vmatpush1.bf16.msra.mxu0 %v93
  %116 = vmatprep.subr.bf16.mxu0 0
  %117 = vmatpush1.bf16.msra.mxu0 %v92
  %118 = vmatprep.subr.bf16.mxu0 0
  %119 = vmatpush1.bf16.msra.mxu0 %v91
  %120 = vmatprep.subr.bf16.mxu0 0
  %121 = vmatpush1.bf16.msra.mxu0 %v90
  %122 = vmatprep.subr.bf16.mxu0 0
  %123 = vmatpush2.bf16.msra.mxu0 0
  %124 = vmatprep.subr.bf16.mxu0 0
  %125 = vmatpush2.bf16.msra.mxu0 0
  %126 = vmatprep.subr.bf16.mxu0 0
  %127 = vmatpush2.bf16.msra.mxu0 0
  %128 = vmatprep.subr.bf16.mxu0 0
  %129 = vmatpush2.bf16.msra.mxu0 0
  %130 = vmatprep.subr.bf16.mxu0 0
  %131 = vmatpush2.bf16.msra.mxu0 0
  %132 = vmatprep.subr.bf16.mxu0 0
  %133 = vmatpush2.bf16.msra.mxu0 0
  %134 = vmatprep.subr.bf16.mxu0 0
  %135 = vmatpush2.bf16.msra.mxu0 0
  %136 = vmatprep.subr.bf16.mxu0 0
  %137 = vmatpush2.bf16.msra.mxu0 0
  %138 = vmatprep.mubr.bf16.mxu0 0
  %139 = vmatmul.mubr.bf16.gmra.mxu0 %v56
  %v140 = vpop.f32.mrf.mxu0
  %v141 = vadd.f32 %v50, %v140
  %v142 = vpop.f32.mrf.mxu0
  %v143 = vpop.f32.mrf.mxu0
  %v144 = vadd.f32 %v50, %v143
  %v145 = vpop.f32.mrf.mxu0
  %146 = vdwg.mxu0
  %v147 = vmax.f32 %v141, 0.0
  %v148 = vmax.f32 %v144, 0.0
  %v149 = vld [vmem:[#allocation2] sm:$0xff]
  %v150 = vld [vmem:[#allocation2 + $0x8] sm:$0xff]
  %v151 = vpack.c.bf16 %v148, %v147
  %v152 = vld [vmem:[%s3] sm:$0xf]
  %v153 = vld [vmem:[%s3 + $0x4] sm:$0xf]
  %v154 = vld [vmem:[%s3 + $0x8] sm:$0xf]
  %v155 = vld [vmem:[%s3 + $0xc] sm:$0xf]
  %v156 = vld [vmem:[%s3 + $0x10] sm:$0xf]
  %v157 = vld [vmem:[%s3 + $0x14] sm:$0xf]
  %v158 = vld [vmem:[%s3 + $0x18] sm:$0xf]
  %v159 = vld [vmem:[%s3 + $0x1c] sm:$0xf]
  %v160 = vld [vmem:[%s3 + $0x20] sm:$0xf]
  %v161 = vld [vmem:[%s3 + $0x24] sm:$0xf]
  %v162 = vld [vmem:[%s3 + $0x28] sm:$0xf]
  %v163 = vld [vmem:[%s3 + $0x2c] sm:$0xf]
  %v164 = vld [vmem:[%s3 + $0x30] sm:$0xf]
  %v165 = vld [vmem:[%s3 + $0x34] sm:$0xf]
  %v166 = vld [vmem:[%s3 + $0x38] sm:$0xf]
  %v167 = vld [vmem:[%s3 + $0x3c] sm:$0xf]
  %v184 = vunpack.c.l.b16 %v152
  %v185 = vunpack.c.l.b16 %v153
  %v186 = vunpack.c.l.b16 %v154
  %v187 = vunpack.c.l.b16 %v155
  %v188 = vunpack.c.l.b16 %v156
  %v189 = vunpack.c.l.b16 %v157
  %v190 = vunpack.c.l.b16 %v158
  %v191 = vunpack.c.l.b16 %v159
  %v192 = vunpack.c.l.b16 %v160
  %v193 = vunpack.c.l.b16 %v161
  %v194 = vunpack.c.l.b16 %v162
  %v195 = vunpack.c.l.b16 %v163
  %v196 = vunpack.c.l.b16 %v164
  %v197 = vunpack.c.l.b16 %v165
  %v198 = vunpack.c.l.b16 %v166
  %v199 = vunpack.c.l.b16 %v167
  %v200 = vpack.c.b16 %v185, %v184
  %v201 = vpack.c.b16 %v187, %v186
  %v202 = vpack.c.b16 %v189, %v188
  %v203 = vpack.c.b16 %v191, %v190
  %v204 = vpack.c.b16 %v193, %v192
  %v205 = vpack.c.b16 %v195, %v194
  %v206 = vpack.c.b16 %v197, %v196
  %v207 = vpack.c.b16 %v199, %v198
  %216 = vmatprep.subr.bf16.mxu0 0
  %217 = vmatpush1.bf16.msra.mxu0 %v207
  %218 = vmatprep.subr.bf16.mxu0 0
  %219 = vmatpush1.bf16.msra.mxu0 %v206
  %220 = vmatprep.subr.bf16.mxu0 0
  %221 = vmatpush1.bf16.msra.mxu0 %v205
  %222 = vmatprep.subr.bf16.mxu0 0
  %223 = vmatpush1.bf16.msra.mxu0 %v204
  %224 = vmatprep.subr.bf16.mxu0 0
  %225 = vmatpush1.bf16.msra.mxu0 %v203
  %226 = vmatprep.subr.bf16.mxu0 0
  %227 = vmatpush1.bf16.msra.mxu0 %v202
  %228 = vmatprep.subr.bf16.mxu0 0
  %229 = vmatpush1.bf16.msra.mxu0 %v201
  %230 = vmatprep.subr.bf16.mxu0 0
  %231 = vmatpush1.bf16.msra.mxu0 %v200
  %232 = vmatprep.subr.bf16.mxu0 0
  %233 = vmatpush2.bf16.msra.mxu0 0
  %234 = vmatprep.subr.bf16.mxu0 0
  %235 = vmatpush2.bf16.msra.mxu0 0
  %236 = vmatprep.subr.bf16.mxu0 0
  %237 = vmatpush2.bf16.msra.mxu0 0
  %238 = vmatprep.subr.bf16.mxu0 0
  %239 = vmatpush2.bf16.msra.mxu0 0
  %240 = vmatprep.subr.bf16.mxu0 0
  %241 = vmatpush2.bf16.msra.mxu0 0
  %242 = vmatprep.subr.bf16.mxu0 0
  %243 = vmatpush2.bf16.msra.mxu0 0
  %244 = vmatprep.subr.bf16.mxu0 0
  %245 = vmatpush2.bf16.msra.mxu0 0
  %246 = vmatprep.subr.bf16.mxu0 0
  %247 = vmatpush2.bf16.msra.mxu0 0
  %248 = vmatprep.mubr.bf16.mxu0 0
  %249 = vmatmul.mubr.bf16.gmra.mxu0 %v151
  %v250 = vpop.f32.mrf.mxu0
  %v251 = vadd.f32 0.0, %v250
  %v252 = vpop.f32.mrf.mxu0
  %v253 = vpop.f32.mrf.mxu0
  %v254 = vadd.f32 0.0, %v253
  %v255 = vpop.f32.mrf.mxu0
  %256 = vdwg.mxu0
  %v257 = vadd.f32 %v149, %v251
  %v258 = vadd.f32 %v150, %v254
  %259 = vst [vmem:[#allocation2] sm:$0xff] %v257
  %260 = vst [vmem:[#allocation2 + $0x8] sm:$0xff] %v258
  // Predicated region
  $region26: #{feed_forward.1} parent=0 // pred_check
    %p261 = pneg %p21
  $region27: #{feed_forward.1} parent=0 // pred_check_branch
    %263 = sbr.rel (%p261) target = $region29
  $region28: #{feed_forward.1} parent=0 // pred_region
    %v264 = vld [vmem:[#allocation2] sm:$0xff]
    %v265 = vld [vmem:[#allocation2 + $0x8] sm:$0xff]
    %v266 = vld [vmem:[%s4] sm:$0x1]
    %v268 = vlaneseq
    %v269 = vshrl.u32 %v268, 7
    %v270 = vsub.s32 0, %v269
    %v271 = vrot.slane %v266, %v270
    %v273 = vadd.f32 %v264, %v271
    %v274 = vadd.f32 %v265, %v271
    %275 = vst [vmem:[%s5] sm:$0xff] %v273
    %276 = vst [vmem:[%s5 + $0x8] sm:$0xff] %v274
  $region29: #{feed_forward.1} parent=0 // pred_fallthru
    _
  // Predicated region
  $region30: #{feed_forward.1} parent=0 // pred_check
    _
  $region31: #{feed_forward.1} parent=0 // pred_check_branch
    %278 = sbr.rel (0) target = $region33
  $region32: #{feed_forward.1} parent=0 // pred_region
    _
  $region33: #{feed_forward.1} parent=0 // pred_fallthru
    _
  // Predicated region
  $region34: #{feed_forward.1} parent=0 // pred_check
    _
  $region35: #{feed_forward.1} parent=0 // pred_check_branch
    %280 = sbr.rel (0) target = $region37
  $region36: #{feed_forward.1} parent=0 // pred_region
    _
  $region37: #{feed_forward.1} parent=0 // pred_fallthru
    _

</llo_original>
